<compile_context>
chip_gen: v7x
topology: tpu7x:2x2x1
jax: 0.10.0
libtpu: 0.0.40
codegen_flags: <defaults>
</compile_context>

<pallas_src>
import functools

import jax
import jax.numpy as jnp
from jax.experimental import pallas as pl
from jax.experimental.pallas import tpu as pltpu


def _round_up(x, m):
    return (x + m - 1) // m * m


def _generative_kernel(z_ref, w3_ref, b3_ref, w4_ref, b4_ref, o_ref):
    # fc3: (blk, latent) @ (latent, hid_p) + (1, hid_p), ReLU
    h = jnp.dot(z_ref[...], w3_ref[...], preferred_element_type=jnp.float32)
    h = jnp.maximum(h + b3_ref[...], 0.0)
    # fc4: (blk, hid_p) @ (hid_p, out_p) + (1, out_p), sigmoid
    y = jnp.dot(h, w4_ref[...], preferred_element_type=jnp.float32)
    y = y + b4_ref[...]
    o_ref[...] = jax.nn.sigmoid(y).astype(o_ref.dtype)


@functools.partial(jax.jit, static_argnames=("block_b",))
def generative_forward(z, w3, b3, w4, b4, *, block_b=256):
    """Pallas equivalent of GenerativeModel.forward.

    z:  (B, latent_dim) float32
    w3: (latent_dim, hidden_dim)   b3: (hidden_dim,) or (1, hidden_dim)
    w4: (hidden_dim, output_dim)   b4: (output_dim,) or (1, output_dim)
    returns (B, output_dim) float32 in [0, 1]
    """
    B, latent_dim = z.shape
    hidden_dim = w3.shape[1]
    output_dim = w4.shape[1]
    assert block_b % 8 == 0, "block_b must be a multiple of 8"

    # Lane-dense padded feature dims (multiples of 128). Padded columns/rows
    # are zero so they cannot leak into the sliced output.
    hid_p = _round_up(hidden_dim, 128)
    out_p = _round_up(output_dim, 128)

    # Effective batch block: don't exceed the (rounded-up) batch, pad batch
    # so the grid divides evenly. Padded rows are sliced off at the end.
    blk = min(block_b, _round_up(B, 8))
    b_pad = _round_up(B, blk)

    z_p = jnp.pad(z, ((0, b_pad - B), (0, 0))) if b_pad != B else z
    w3_p = jnp.pad(w3, ((0, 0), (0, hid_p - hidden_dim)))
    b3_p = jnp.pad(jnp.reshape(b3, (1, hidden_dim)), ((0, 0), (0, hid_p - hidden_dim)))
    w4_p = jnp.pad(w4, ((0, hid_p - hidden_dim), (0, out_p - output_dim)))
    b4_p = jnp.pad(jnp.reshape(b4, (1, output_dim)), ((0, 0), (0, out_p - output_dim)))

    grid = (b_pad // blk,)

    cost = pl.CostEstimate(
        flops=2 * b_pad * (latent_dim * hid_p + hid_p * out_p),
        transcendentals=b_pad * out_p,  # sigmoid
        bytes_accessed=4 * (z_p.size + w3_p.size + b3_p.size
                            + w4_p.size + b4_p.size + b_pad * out_p),
    )

    out_padded = pl.pallas_call(
        _generative_kernel,
        out_shape=jax.ShapeDtypeStruct((b_pad, out_p), jnp.float32),
        grid_spec=pltpu.PrefetchScalarGridSpec(
            num_scalar_prefetch=0,
            grid=grid,
            in_specs=[
                pl.BlockSpec((blk, latent_dim), lambda i: (i, 0)),
                pl.BlockSpec((latent_dim, hid_p), lambda i: (0, 0)),
                pl.BlockSpec((1, hid_p), lambda i: (0, 0)),
                pl.BlockSpec((hid_p, out_p), lambda i: (0, 0)),
                pl.BlockSpec((1, out_p), lambda i: (0, 0)),
            ],
            out_specs=pl.BlockSpec((blk, out_p), lambda i: (i, 0)),
        ),
        compiler_params=pltpu.CompilerParams(
            dimension_semantics=("parallel",),
        ),
        cost_estimate=cost,
    )(z_p, w3_p, b3_p, w4_p, b4_p)

    # Strip batch padding and the padded output lanes.
    return out_padded[:B, :output_dim]


def init_params(key, latent_dim=20, hidden_dim=400, output_dim=784):
    """Deterministic init mimicking nn.Linear's U(-1/sqrt(fan_in), 1/sqrt(fan_in))."""
    k1, k2, k3, k4 = jax.random.split(key, 4)
    bound3 = 1.0 / jnp.sqrt(latent_dim)
    bound4 = 1.0 / jnp.sqrt(hidden_dim)
    # Stored as (in, out) == transpose of PyTorch's (out, in) weight layout.
    w3 = jax.random.uniform(k1, (latent_dim, hidden_dim), jnp.float32, -bound3, bound3)
    b3 = jax.random.uniform(k2, (1, hidden_dim), jnp.float32, -bound3, bound3)
    w4 = jax.random.uniform(k3, (hidden_dim, output_dim), jnp.float32, -bound4, bound4)
    b4 = jax.random.uniform(k4, (1, output_dim), jnp.float32, -bound4, bound4)
    return w3, b3, w4, b4


if __name__ == "__main__":
    latent_dim, hidden_dim, output_dim = 20, 400, 784

    key = jax.random.PRNGKey(0)
    kz, kp, kz2 = jax.random.split(key, 3)
    w3, b3, w4, b4 = init_params(kp, latent_dim, hidden_dim, output_dim)

    def reference(z):
        return jax.nn.sigmoid(jnp.maximum(z @ w3 + b3, 0.0) @ w4 + b4)

    # Test 1: small batch (like sample_prior(8)), single grid step.
    batch = 8
    z = jax.random.normal(kz, (batch, latent_dim), jnp.float32)
    out = jax.block_until_ready(generative_forward(z, w3, b3, w4, b4))
    assert out.shape == (batch, output_dim)
    assert jnp.allclose(out, reference(z), atol=1e-5, rtol=1e-5)
    assert bool(jnp.all((out >= 0.0) & (out <= 1.0)))

    # Test 2: ragged batch + multi-block grid (exercises batch padding path).
    batch2 = 20
    z2 = jax.random.normal(kz2, (batch2, latent_dim), jnp.float32)
    out2 = jax.block_until_ready(generative_forward(z2, w3, b3, w4, b4, block_b=16))
    assert out2.shape == (batch2, output_dim)
    assert jnp.allclose(out2, reference(z2), atol=1e-5, rtol=1e-5)

    # TODO(synk): sample()/sample_prior()/log_prob_prior() are distribution
    # utilities, not part of the forward pass; use jax.random on the host.
    print("KERNEL_OK")
</pallas_src>

<mosaic_0001>
module attributes {stable_mosaic.version = 11 : i64} {
  func.func @_generative_kernel(%arg0: i32, %arg1: memref<8x20xf32, #tpu.memory_space<vmem>>, %arg2: memref<20x512xf32, #tpu.memory_space<vmem>>, %arg3: memref<1x512xf32, #tpu.memory_space<vmem>>, %arg4: memref<512x896xf32, #tpu.memory_space<vmem>>, %arg5: memref<1x896xf32, #tpu.memory_space<vmem>>, %arg6: memref<8x896xf32, #tpu.memory_space<vmem>>) attributes {dimension_semantics = [#tpu.dimension_semantics<parallel>], iteration_bounds = array<i64: 1>, scalar_prefetch = 0 : i64, scratch_operands = 0 : i64, tpu.core_type = #tpu.core_type<tc>, window_params = [{transform_indices = @transform_0, window_bounds = array<i64: 8, 20>}, {pipeline_mode = #tpu.pipeline_mode<synchronous>, transform_indices = @transform_1, window_bounds = array<i64: 20, 512>}, {pipeline_mode = #tpu.pipeline_mode<synchronous>, transform_indices = @transform_2, window_bounds = array<i64: 1, 512>}, {pipeline_mode = #tpu.pipeline_mode<synchronous>, transform_indices = @transform_3, window_bounds = array<i64: 512, 896>}, {pipeline_mode = #tpu.pipeline_mode<synchronous>, transform_indices = @transform_4, window_bounds = array<i64: 1, 896>}, {transform_indices = @transform_5, window_bounds = array<i64: 8, 896>}]} {
    %c0 = arith.constant 0 : index
    %c0_0 = arith.constant 0 : index
    %0 = vector.load %arg1[%c0, %c0_0] : memref<8x20xf32, #tpu.memory_space<vmem>>, vector<8x20xf32>
    %c0_1 = arith.constant 0 : index
    %c0_2 = arith.constant 0 : index
    %1 = vector.load %arg2[%c0_1, %c0_2] : memref<20x512xf32, #tpu.memory_space<vmem>>, vector<20x512xf32>
    %cst = arith.constant dense<0.000000e+00> : vector<8x512xf32>
    %2 = tpu.matmul %0, %1, %cst {dimension_numbers = #tpu.dot_dimension_numbers<[1], [0], [0], [1], [0, 0, 1, 1], [], []>} : vector<8x20xf32>, vector<20x512xf32>, vector<8x512xf32> -> vector<8x512xf32>
    %c0_3 = arith.constant 0 : index
    %c0_4 = arith.constant 0 : index
    %3 = vector.load %arg3[%c0_3, %c0_4] : memref<1x512xf32, #tpu.memory_space<vmem>>, vector<1x512xf32>
    %4 = vector.broadcast %3 : vector<1x512xf32> to vector<8x512xf32>
    %5 = arith.addf %2, %4 : vector<8x512xf32>
    %cst_5 = arith.constant 0.000000e+00 : f32
    %6 = vector.broadcast %cst_5 : f32 to vector<8x512xf32>
    %7 = arith.maximumf %5, %6 : vector<8x512xf32>
    %c0_6 = arith.constant 0 : index
    %c0_7 = arith.constant 0 : index
    %8 = vector.load %arg4[%c0_6, %c0_7] : memref<512x896xf32, #tpu.memory_space<vmem>>, vector<512x896xf32>
    %cst_8 = arith.constant dense<0.000000e+00> : vector<8x896xf32>
    %9 = tpu.matmul %7, %8, %cst_8 {dimension_numbers = #tpu.dot_dimension_numbers<[1], [0], [0], [1], [0, 0, 1, 1], [], []>} : vector<8x512xf32>, vector<512x896xf32>, vector<8x896xf32> -> vector<8x896xf32>
    %c0_9 = arith.constant 0 : index
    %c0_10 = arith.constant 0 : index
    %10 = vector.load %arg5[%c0_9, %c0_10] : memref<1x896xf32, #tpu.memory_space<vmem>>, vector<1x896xf32>
    %11 = vector.broadcast %10 : vector<1x896xf32> to vector<8x896xf32>
    %12 = arith.addf %9, %11 : vector<8x896xf32>
    %13 = arith.negf %12 : vector<8x896xf32>
    %14 = math.exp %13 : vector<8x896xf32>
    %cst_11 = arith.constant 1.000000e+00 : f32
    %15 = vector.broadcast %cst_11 : f32 to vector<8x896xf32>
    %16 = arith.addf %15, %14 : vector<8x896xf32>
    %17 = arith.divf %15, %16 : vector<8x896xf32>
    %c0_12 = arith.constant 0 : index
    %c0_13 = arith.constant 0 : index
    %18 = vector.load %arg6[%c0_12, %c0_13] : memref<8x896xf32, #tpu.memory_space<vmem>>, vector<8x896xf32>
    tpu.vector_store %arg6[%c0_12, %c0_13], %17 {strides = array<i32>} : memref<8x896xf32, #tpu.memory_space<vmem>>, vector<8x896xf32>,
    return
  }
  func.func @transform_0(%arg0: i32) -> (i32, i32) {
    %c0_i32 = arith.constant 0 : i32
    %c0_i32_0 = arith.constant 0 : i32
    return %arg0, %c0_i32 : i32, i32
  }
  func.func @transform_1(%arg0: i32) -> (i32, i32) {
    %c0_i32 = arith.constant 0 : i32
    %c0_i32_0 = arith.constant 0 : i32
    %c0_i32_1 = arith.constant 0 : i32
    return %c0_i32, %c0_i32_0 : i32, i32
  }
  func.func @transform_2(%arg0: i32) -> (i32, i32) {
    %c0_i32 = arith.constant 0 : i32
    %c0_i32_0 = arith.constant 0 : i32
    %c0_i32_1 = arith.constant 0 : i32
    return %c0_i32, %c0_i32_0 : i32, i32
  }
  func.func @transform_3(%arg0: i32) -> (i32, i32) {
    %c0_i32 = arith.constant 0 : i32
    %c0_i32_0 = arith.constant 0 : i32
    %c0_i32_1 = arith.constant 0 : i32
    return %c0_i32, %c0_i32_0 : i32, i32
  }
  func.func @transform_4(%arg0: i32) -> (i32, i32) {
    %c0_i32 = arith.constant 0 : i32
    %c0_i32_0 = arith.constant 0 : i32
    %c0_i32_1 = arith.constant 0 : i32
    return %c0_i32, %c0_i32_0 : i32, i32
  }
  func.func @transform_5(%arg0: i32) -> (i32, i32) {
    %c0_i32 = arith.constant 0 : i32
    %c0_i32_0 = arith.constant 0 : i32
    return %arg0, %c0_i32 : i32, i32
  }
}

</mosaic_0001>

<llo_original>
// kernel: generative_forward.1
$region0: #{generative_forward.1}
  #allocation0 [shape = 'u32[]', space=smem, size = 0x4, offset = 0x4, fixed_abs, tag = 'smem constant byte address 0x4 - core index']
  #allocation1 [shape = 'u32[144,128]{1,0:T(1,128)}', space=vmem, size = 0x12000, scoped, tag = 'internal scratch']
  %s0 = inlined_call_operand.vmem [shape: f32[8,20], index: 0, kind: input, shape index: {}]
  %s1 = inlined_call_operand.vmem [shape: f32[20,512], index: 1, kind: input, shape index: {}]
  %s2 = inlined_call_operand.vmem [shape: f32[1,512], index: 2, kind: input, shape index: {}]
  %s3 = inlined_call_operand.vmem [shape: f32[512,896], index: 3, kind: input, shape index: {}]
  %s4 = inlined_call_operand.vmem [shape: f32[1,896], index: 4, kind: input, shape index: {}]
  %s5 = inlined_call_operand.hbm [shape: f32[8,896], index: 5, kind: output, shape index: {}]
  %s6 = sld [smem:[#allocation0]]
  $region30: #{generative_forward.1} parent=0
    _
  %s8 = ssub.s32 1, %s6
  %s9 = scalar_select 0, %s8, %s6
  $region1: #{generative_forward.1} parent=0
    #allocation2 [shape = 'u8[28672]{0}', space=vmem, size = 0x7000, scoped, tag = 'output window, operand 0, single buffered']
    #allocation3 [shape = 's32[1]{0}', space=sflag, size = 0x4, scoped, tag = 'scoped memory for generative_forward.1']
    %10 = vsyncpa [#allocation3], 0
    // Predicated region
    $region2: #{generative_forward.1} parent=1 // pred_check
      _
    $region3: #{generative_forward.1} parent=1 // pred_check_branch
      %12 = sbr.rel (0) target = $region5
    $region4: #{generative_forward.1} parent=1 // pred_region
      _
    $region5: #{generative_forward.1} parent=1 // pred_fallthru
      _
    // Predicated region
    $region6: #{generative_forward.1} parent=1 // pred_check
      _
    $region7: #{generative_forward.1} parent=1 // pred_check_branch
      %14 = sbr.rel (0) target = $region9
    $region8: #{generative_forward.1} parent=1 // pred_region
      _
    $region9: #{generative_forward.1} parent=1 // pred_fallthru
      _
    // Predicated region
    $region10: #{generative_forward.1} parent=1 // pred_check
      _
    $region11: #{generative_forward.1} parent=1 // pred_check_branch
      %16 = sbr.rel (0) target = $region13
    $region12: #{generative_forward.1} parent=1 // pred_region
      _
    $region13: #{generative_forward.1} parent=1 // pred_fallthru
      _
    // Predicated region
    $region14: #{generative_forward.1} parent=1 // pred_check
      _
    $region15: #{generative_forward.1} parent=1 // pred_check_branch
      %18 = sbr.rel (0) target = $region17
    $region16: #{generative_forward.1} parent=1 // pred_region
      _
    $region17: #{generative_forward.1} parent=1 // pred_fallthru
      _
    // Predicated region
    $region18: #{generative_forward.1} parent=1 // pred_check
      _
    $region19: #{generative_forward.1} parent=1 // pred_check_branch
      %20 = sbr.rel (0) target = $region21
    $region20: #{generative_forward.1} parent=1 // pred_region
      _
    $region21: #{generative_forward.1} parent=1 // pred_fallthru
      _
    %v21 = vld [vmem:[%s0] sm:$0xff]
    %v22 = vld [vmem:[%s1] sm:$0xff]
    %v23 = vld [vmem:[%s1 + $0x8] sm:$0xff]
    %v24 = vld [vmem:[%s1 + $0x10] sm:$0xff]
    %v25 = vld [vmem:[%s1 + $0x18] sm:$0xff]
    %v26 = vld [vmem:[%s1 + $0x20] sm:$0xff]
    %v27 = vld [vmem:[%s1 + $0x28] sm:$0xff]
    %v28 = vld [vmem:[%s1 + $0x30] sm:$0xff]
    %v29 = vld [vmem:[%s1 + $0x38] sm:$0xff]
    %v30 = vld [vmem:[%s1 + $0x40] sm:$0xf]
    %v31 = vld [vmem:[%s1 + $0x48] sm:$0xf]
    %v32 = vld [vmem:[%s1 + $0x50] sm:$0xf]
    %v33 = vld [vmem:[%s1 + $0x58] sm:$0xf]
    %v34 = vld [vmem:[%s2] sm:$0xf]
    %v36 = vlaneseq
    %v37 = vshrl.u32 %v36, 7
    %v38 = vsub.s32 0, %v37
    %v39 = vrot.slane %v34, %v38
    %v40 = vlaneseq
    %v41 = vshrl.u32 %v40, 7
    %v42 = vsub.s32 1, %v41
    %v43 = vrot.slane %v34, %v42
    %v44 = vlaneseq
    %v45 = vshrl.u32 %v44, 7
    %v46 = vsub.s32 2, %v45
    %v47 = vrot.slane %v34, %v46
    %v48 = vlaneseq
    %v49 = vshrl.u32 %v48, 7
    %v50 = vsub.s32 3, %v49
    %v51 = vrot.slane %v34, %v50
    %vm56 = vcmask 162816
    %v58 = vsel %vm56, %v21, 0
    %vm60 = vcmask 1043456
    %v62 = vsel %vm60, %v30, 0
    %v65 = vsel %vm60, %v31, 0
    %v68 = vsel %vm60, %v32, 0
    %v71 = vsel %vm60, %v33, 0
    %73 = vmatprep.subr.mxu0 %v23
    %74 = vmatpush1.msra.mxu0 %v22
    %75 = vmatprep.subr.mxu0 %v27
    %76 = vmatpush1.msra.mxu0 %v26
    %77 = vmatprep.subr.mxu0 %v65
    %78 = vmatpush1.msra.mxu0 %v62
    %79 = vmatprep.subr.mxu0 0.0
    %80 = vmatpush1.msra.mxu0 0.0
    %81 = vmatprep.subr.mxu0 0.0
    %82 = vmatpush1.msra.mxu0 0.0
    %83 = vmatprep.subr.mxu0 0.0
    %84 = vmatpush1.msra.mxu0 0.0
    %85 = vmatprep.subr.mxu0 0.0
    %86 = vmatpush1.msra.mxu0 0.0
    %87 = vmatprep.subr.mxu0 0.0
    %88 = vmatpush1.msra.mxu0 0.0
    %89 = vmatprep.subr.mxu0 0.0
    %90 = vmatpush1.msra.mxu0 0.0
    %91 = vmatprep.subr.mxu0 0.0
    %92 = vmatpush1.msra.mxu0 0.0
    %93 = vmatprep.subr.mxu0 0.0
    %94 = vmatpush1.msra.mxu0 0.0
    %95 = vmatprep.subr.mxu0 0.0
    %96 = vmatpush1.msra.mxu0 0.0
    %97 = vmatprep.subr.mxu0 0.0
    %98 = vmatpush1.msra.mxu0 0.0
    %99 = vmatprep.subr.mxu0 0.0
    %100 = vmatpush1.msra.mxu0 0.0
    %101 = vmatprep.subr.mxu0 0.0
    %102 = vmatpush1.msra.mxu0 0.0
    %103 = vmatprep.subr.mxu0 0.0
    %104 = vmatpush1.msra.mxu0 0.0
    %105 = vmatprep.subr.mxu0 0.0
    %106 = vmatpush1.msra.mxu0 0.0
    %107 = vmatprep.subr.mxu0 0.0
    %108 = vmatpush1.msra.mxu0 0.0
    %109 = vmatprep.subr.mxu0 0.0
    %110 = vmatpush1.msra.mxu0 0.0
    %111 = vmatprep.subr.mxu0 0.0
    %112 = vmatpush1.msra.mxu0 0.0
    %113 = vmatprep.subr.mxu0 0.0
    %114 = vmatpush1.msra.mxu0 0.0
    %115 = vmatprep.subr.mxu0 0.0
    %116 = vmatpush1.msra.mxu0 0.0
    %117 = vmatprep.subr.mxu0 0.0
    %118 = vmatpush1.msra.mxu0 0.0
    %119 = vmatprep.subr.mxu0 0.0
    %120 = vmatpush1.msra.mxu0 0.0
    %121 = vmatprep.subr.mxu0 0.0
    %122 = vmatpush1.msra.mxu0 0.0
    %123 = vmatprep.subr.mxu0 0.0
    %124 = vmatpush1.msra.mxu0 0.0
    %125 = vmatprep.subr.mxu0 0.0
    %126 = vmatpush1.msra.mxu0 0.0
    %127 = vmatprep.subr.mxu0 0.0
    %128 = vmatpush1.msra.mxu0 0.0
    %129 = vmatprep.subr.mxu0 0.0
    %130 = vmatpush1.msra.mxu0 0.0
    %131 = vmatprep.subr.mxu0 0.0
    %132 = vmatpush1.msra.mxu0 0.0
    %133 = vmatprep.subr.mxu0 0.0
    %134 = vmatpush1.msra.mxu0 0.0
    %135 = vmatprep.subr.mxu0 0.0
    %136 = vmatpush1.msra.mxu0 0.0
    %137 = vmatprep.mubr.f32.mxu0 0.0
    %138 = vmatmul.mubr.f32.gmra.mrb[0].mxu0 %v58
    %v139 = vpop.f32.mrb[0].mxu0
    %v140 = vadd.f32 %v39, %v139
    %v141 = vpop.f32.mrb[0].mxu0
    %v142 = vadd.f32 %v43, %v141
    %143 = vdwg.mxu0
    %144 = vmatprep.subr.mxu0 %v25
    %145 = vmatpush1.msra.mxu0 %v24
    %146 = vmatprep.subr.mxu0 %v29
    %147 = vmatpush1.msra.mxu0 %v28
    %148 = vmatprep.subr.mxu0 %v71
    %149 = vmatpush1.msra.mxu0 %v68
    %150 = vmatprep.subr.mxu0 0.0
    %151 = vmatpush1.msra.mxu0 0.0
    %152 = vmatprep.subr.mxu0 0.0
    %153 = vmatpush1.msra.mxu0 0.0
    %154 = vmatprep.subr.mxu0 0.0
    %155 = vmatpush1.msra.mxu0 0.0
    %156 = vmatprep.subr.mxu0 0.0
    %157 = vmatpush1.msra.mxu0 0.0
    %158 = vmatprep.subr.mxu0 0.0
    %159 = vmatpush1.msra.mxu0 0.0
    %160 = vmatprep.subr.mxu0 0.0
    %161 = vmatpush1.msra.mxu0 0.0
    %162 = vmatprep.subr.mxu0 0.0
    %163 = vmatpush1.msra.mxu0 0.0
    %164 = vmatprep.subr.mxu0 0.0
    %165 = vmatpush1.msra.mxu0 0.0
    %166 = vmatprep.subr.mxu0 0.0
    %167 = vmatpush1.msra.mxu0 0.0
    %168 = vmatprep.subr.mxu0 0.0
    %169 = vmatpush1.msra.mxu0 0.0
    %170 = vmatprep.subr.mxu0 0.0
    %171 = vmatpush1.msra.mxu0 0.0
    %172 = vmatprep.subr.mxu0 0.0
    %173 = vmatpush1.msra.mxu0 0.0
    %174 = vmatprep.subr.mxu0 0.0
    %175 = vmatpush1.msra.mxu0 0.0
    %176 = vmatprep.subr.mxu0 0.0
    %177 = vmatpush1.msra.mxu0 0.0
    %178 = vmatprep.subr.mxu0 0.0
    %179 = vmatpush1.msra.mxu0 0.0
    %180 = vmatprep.subr.mxu0 0.0
    %181 = vmatpush1.msra.mxu0 0.0
    %182 = vmatprep.subr.mxu0 0.0
    %183 = vmatpush1.msra.mxu0 0.0
    %184 = vmatprep.subr.mxu0 0.0
    %185 = vmatpush1.msra.mxu0 0.0
    %186 = vmatprep.subr.mxu0 0.0
    %187 = vmatpush1.msra.mxu0 0.0
    %188 = vmatprep.subr.mxu0 0.0
    %189 = vmatpush1.msra.mxu0 0.0
    %190 = vmatprep.subr.mxu0 0.0
    %191 = vmatpush1.msra.mxu0 0.0
    %192 = vmatprep.subr.mxu0 0.0
    %193 = vmatpush1.msra.mxu0 0.0
    %194 = vmatprep.subr.mxu0 0.0
    %195 = vmatpush1.msra.mxu0 0.0
    %196 = vmatprep.subr.mxu0 0.0
    %197 = vmatpush1.msra.mxu0 0.0
    %198 = vmatprep.subr.mxu0 0.0
    %199 = vmatpush1.msra.mxu0 0.0
    %200 = vmatprep.subr.mxu0 0.0
    %201 = vmatpush1.msra.mxu0 0.0
    %202 = vmatprep.subr.mxu0 0.0
    %203 = vmatpush1.msra.mxu0 0.0
    %204 = vmatprep.subr.mxu0 0.0
    %205 = vmatpush1.msra.mxu0 0.0
    %206 = vmatprep.subr.mxu0 0.0
    %207 = vmatpush1.msra.mxu0 0.0
    %208 = vmatprep.mubr.f32.mxu0 0.0
    %209 = vmatmul.mubr.f32.gmra.mrb[0].mxu0 %v58
    %v210 = vpop.f32.mrb[0].mxu0
    %v211 = vadd.f32 %v47, %v210
    %v212 = vpop.f32.mrb[0].mxu0
    %v213 = vadd.f32 %v51, %v212
    %214 = vdwg.mxu0
    %v215 = vmax.f32 %v140, 0.0
    %v216 = vmax.f32 %v142, 0.0
    %v217 = vmax.f32 %v211, 0.0
    %v218 = vmax.f32 %v213, 0.0
    %v219 = vld [vmem:[%s3] sm:$0xff]
    %v220 = vld [vmem:[%s3 + $0x8] sm:$0xff]
    %v221 = vld [vmem:[%s3 + $0x10] sm:$0xff]
    %v222 = vld [vmem:[%s3 + $0x18] sm:$0xff]
    %v223 = vld [vmem:[%s3 + $0x20] sm:$0xff]
    %v224 = vld [vmem:[%s3 + $0x28] sm:$0xff]
    %v225 = vld [vmem:[%s3 + $0x30] sm:$0xff]
    %v226 = vld [vmem:[%s3 + $0x38] sm:$0xff]
    %v227 = vld [vmem:[%s3 + $0x40] sm:$0xff]
    %v228 = vld [vmem:[%s3 + $0x48] sm:$0xff]
    %v229 = vld [vmem:[%s3 + $0x50] sm:$0xff]
    %v230 = vld [vmem:[%s3 + $0x58] sm:$0xff]
    %v231 = vld [vmem:[%s3 + $0x60] sm:$0xff]
    %v232 = vld [vmem:[%s3 + $0x68] sm:$0xff]
    %v233 = vld [vmem:[%s3 + $0x70] sm:$0xff]
    %v234 = vld [vmem:[%s3 + $0x78] sm:$0xff]
    %v235 = vld [vmem:[%s3 + $0x80] sm:$0xff]
    %v236 = vld [vmem:[%s3 + $0x88] sm:$0xff]
    %v237 = vld [vmem:[%s3 + $0x90] sm:$0xff]
    %v238 = vld [vmem:[%s3 + $0x98] sm:$0xff]
    %v239 = vld [vmem:[%s3 + $0xa0] sm:$0xff]
    %v240 = vld [vmem:[%s3 + $0xa8] sm:$0xff]
    %v241 = vld [vmem:[%s3 + $0xb0] sm:$0xff]
    %v242 = vld [vmem:[%s3 + $0xb8] sm:$0xff]
    %v243 = vld [vmem:[%s3 + $0xc0] sm:$0xff]
    %v244 = vld [vmem:[%s3 + $0xc8] sm:$0xff]
    %v245 = vld [vmem:[%s3 + $0xd0] sm:$0xff]
    %v246 = vld [vmem:[%s3 + $0xd8] sm:$0xff]
    %v247 = vld [vmem:[%s3 + $0xe0] sm:$0xff]
    %v248 = vld [vmem:[%s3 + $0xe8] sm:$0xff]
    %v249 = vld [vmem:[%s3 + $0xf0] sm:$0xff]
    %v250 = vld [vmem:[%s3 + $0xf8] sm:$0xff]
    %v251 = vld [vmem:[%s3 + $0x100] sm:$0xff]
    %v252 = vld [vmem:[%s3 + $0x108] sm:$0xff]
    %v253 = vld [vmem:[%s3 + $0x110] sm:$0xff]
    %v254 = vld [vmem:[%s3 + $0x118] sm:$0xff]
    %v255 = vld [vmem:[%s3 + $0x120] sm:$0xff]
    %v256 = vld [vmem:[%s3 + $0x128] sm:$0xff]
    %v257 = vld [vmem:[%s3 + $0x130] sm:$0xff]
    %v258 = vld [vmem:[%s3 + $0x138] sm:$0xff]
    %v259 = vld [vmem:[%s3 + $0x140] sm:$0xff]
    %v260 = vld [vmem:[%s3 + $0x148] sm:$0xff]
    %v261 = vld [vmem:[%s3 + $0x150] sm:$0xff]
    %v262 = vld [vmem:[%s3 + $0x158] sm:$0xff]
    %v263 = vld [vmem:[%s3 + $0x160] sm:$0xff]
    %v264 = vld [vmem:[%s3 + $0x168] sm:$0xff]
    %v265 = vld [vmem:[%s3 + $0x170] sm:$0xff]
    %v266 = vld [vmem:[%s3 + $0x178] sm:$0xff]
    %v267 = vld [vmem:[%s3 + $0x180] sm:$0xff]
    %v268 = vld [vmem:[%s3 + $0x188] sm:$0xff]
    %v269 = vld [vmem:[%s3 + $0x190] sm:$0xff]
    %v270 = vld [vmem:[%s3 + $0x198] sm:$0xff]
    %v271 = vld [vmem:[%s3 + $0x1a0] sm:$0xff]
    %v272 = vld [vmem:[%s3 + $0x1a8] sm:$0xff]
    %v273 = vld [vmem:[%s3 + $0x1b0] sm:$0xff]
    %v274 = vld [vmem:[%s3 + $0x1b8] sm:$0xff]
    %v275 = vld [vmem:[%s3 + $0x1c0] sm:$0xff]
    %v276 = vld [vmem:[%s3 + $0x1c8] sm:$0xff]
    %v277 = vld [vmem:[%s3 + $0x1d0] sm:$0xff]
    %v278 = vld [vmem:[%s3 + $0x1d8] sm:$0xff]
    %v279 = vld [vmem:[%s3 + $0x1e0] sm:$0xff]
    %v280 = vld [vmem:[%s3 + $0x1e8] sm:$0xff]
    %v281 = vld [vmem:[%s3 + $0x1f0] sm:$0xff]
    %v282 = vld [vmem:[%s3 + $0x1f8] sm:$0xff]
    %v283 = vld [vmem:[%s3 + $0x200] sm:$0xff]
    %v284 = vld [vmem:[%s3 + $0x208] sm:$0xff]
    %v285 = vld [vmem:[%s3 + $0x210] sm:$0xff]
    %v286 = vld [vmem:[%s3 + $0x218] sm:$0xff]
    %v287 = vld [vmem:[%s3 + $0x220] sm:$0xff]
    %v288 = vld [vmem:[%s3 + $0x228] sm:$0xff]
    %v289 = vld [vmem:[%s3 + $0x230] sm:$0xff]
    %v290 = vld [vmem:[%s3 + $0x238] sm:$0xff]
    %v291 = vld [vmem:[%s3 + $0x240] sm:$0xff]
    %v292 = vld [vmem:[%s3 + $0x248] sm:$0xff]
    %v293 = vld [vmem:[%s3 + $0x250] sm:$0xff]
    %v294 = vld [vmem:[%s3 + $0x258] sm:$0xff]
    %v295 = vld [vmem:[%s3 + $0x260] sm:$0xff]
    %v296 = vld [vmem:[%s3 + $0x268] sm:$0xff]
    %v297 = vld [vmem:[%s3 + $0x270] sm:$0xff]
    %v298 = vld [vmem:[%s3 + $0x278] sm:$0xff]
    %v299 = vld [vmem:[%s3 + $0x280] sm:$0xff]
    %v300 = vld [vmem:[%s3 + $0x288] sm:$0xff]
    %v301 = vld [vmem:[%s3 + $0x290] sm:$0xff]
    %v302 = vld [vmem:[%s3 + $0x298] sm:$0xff]
    %v303 = vld [vmem:[%s3 + $0x2a0] sm:$0xff]
    %v304 = vld [vmem:[%s3 + $0x2a8] sm:$0xff]
    %v305 = vld [vmem:[%s3 + $0x2b0] sm:$0xff]
    %v306 = vld [vmem:[%s3 + $0x2b8] sm:$0xff]
    %v307 = vld [vmem:[%s3 + $0x2c0] sm:$0xff]
    %v308 = vld [vmem:[%s3 + $0x2c8] sm:$0xff]
    %v309 = vld [vmem:[%s3 + $0x2d0] sm:$0xff]
    %v310 = vld [vmem:[%s3 + $0x2d8] sm:$0xff]
    %v311 = vld [vmem:[%s3 + $0x2e0] sm:$0xff]
    %v312 = vld [vmem:[%s3 + $0x2e8] sm:$0xff]
    %v313 = vld [vmem:[%s3 + $0x2f0] sm:$0xff]
    %v314 = vld [vmem:[%s3 + $0x2f8] sm:$0xff]
    %v315 = vld [vmem:[%s3 + $0x300] sm:$0xff]
    %v316 = vld [vmem:[%s3 + $0x308] sm:$0xff]
    %v317 = vld [vmem:[%s3 + $0x310] sm:$0xff]
    %v318 = vld [vmem:[%s3 + $0x318] sm:$0xff]
    %v319 = vld [vmem:[%s3 + $0x320] sm:$0xff]
    %v320 = vld [vmem:[%s3 + $0x328] sm:$0xff]
    %v321 = vld [vmem:[%s3 + $0x330] sm:$0xff]
    %v322 = vld [vmem:[%s3 + $0x338] sm:$0xff]
    %v323 = vld [vmem:[%s3 + $0x340] sm:$0xff]
    %v324 = vld [vmem:[%s3 + $0x348] sm:$0xff]
    %v325 = vld [vmem:[%s3 + $0x350] sm:$0xff]
    %v326 = vld [vmem:[%s3 + $0x358] sm:$0xff]
    %v327 = vld [vmem:[%s3 + $0x360] sm:$0xff]
    %v328 = vld [vmem:[%s3 + $0x368] sm:$0xff]
    %v329 = vld [vmem:[%s3 + $0x370] sm:$0xff]
    %v330 = vld [vmem:[%s3 + $0x378] sm:$0xff]
    %v331 = vld [vmem:[%s3 + $0x380] sm:$0xff]
    %v332 = vld [vmem:[%s3 + $0x388] sm:$0xff]
    %v333 = vld [vmem:[%s3 + $0x390] sm:$0xff]
    %v334 = vld [vmem:[%s3 + $0x398] sm:$0xff]
    %v335 = vld [vmem:[%s3 + $0x3a0] sm:$0xff]
    %v336 = vld [vmem:[%s3 + $0x3a8] sm:$0xff]
    %v337 = vld [vmem:[%s3 + $0x3b0] sm:$0xff]
    %v338 = vld [vmem:[%s3 + $0x3b8] sm:$0xff]
    %v339 = vld [vmem:[%s3 + $0x3c0] sm:$0xff]
    %v340 = vld [vmem:[%s3 + $0x3c8] sm:$0xff]
    %v341 = vld [vmem:[%s3 + $0x3d0] sm:$0xff]
    %v342 = vld [vmem:[%s3 + $0x3d8] sm:$0xff]
    %v343 = vld [vmem:[%s3 + $0x3e0] sm:$0xff]
    %v344 = vld [vmem:[%s3 + $0x3e8] sm:$0xff]
    %v345 = vld [vmem:[%s3 + $0x3f0] sm:$0xff]
    %v346 = vld [vmem:[%s3 + $0x3f8] sm:$0xff]
    %v347 = vld [vmem:[%s3 + $0x400] sm:$0xff]
    %v348 = vld [vmem:[%s3 + $0x408] sm:$0xff]
    %v349 = vld [vmem:[%s3 + $0x410] sm:$0xff]
    %v350 = vld [vmem:[%s3 + $0x418] sm:$0xff]
    %v351 = vld [vmem:[%s3 + $0x420] sm:$0xff]
    %v352 = vld [vmem:[%s3 + $0x428] sm:$0xff]
    %v353 = vld [vmem:[%s3 + $0x430] sm:$0xff]
    %v354 = vld [vmem:[%s3 + $0x438] sm:$0xff]
    %v355 = vld [vmem:[%s3 + $0x440] sm:$0xff]
    %v356 = vld [vmem:[%s3 + $0x448] sm:$0xff]
    %v357 = vld [vmem:[%s3 + $0x450] sm:$0xff]
    %v358 = vld [vmem:[%s3 + $0x458] sm:$0xff]
    %v359 = vld [vmem:[%s3 + $0x460] sm:$0xff]
    %v360 = vld [vmem:[%s3 + $0x468] sm:$0xff]
    %v361 = vld [vmem:[%s3 + $0x470] sm:$0xff]
    %v362 = vld [vmem:[%s3 + $0x478] sm:$0xff]
    %v363 = vld [vmem:[%s3 + $0x480] sm:$0xff]
    %v364 = vld [vmem:[%s3 + $0x488] sm:$0xff]
    %v365 = vld [vmem:[%s3 + $0x490] sm:$0xff]
    %v366 = vld [vmem:[%s3 + $0x498] sm:$0xff]
    %v367 = vld [vmem:[%s3 + $0x4a0] sm:$0xff]
    %v368 = vld [vmem:[%s3 + $0x4a8] sm:$0xff]
    %v369 = vld [vmem:[%s3 + $0x4b0] sm:$0xff]
    %v370 = vld [vmem:[%s3 + $0x4b8] sm:$0xff]
    %v371 = vld [vmem:[%s3 + $0x4c0] sm:$0xff]
    %v372 = vld [vmem:[%s3 + $0x4c8] sm:$0xff]
    %v373 = vld [vmem:[%s3 + $0x4d0] sm:$0xff]
    %v374 = vld [vmem:[%s3 + $0x4d8] sm:$0xff]
    %v375 = vld [vmem:[%s3 + $0x4e0] sm:$0xff]
    %v376 = vld [vmem:[%s3 + $0x4e8] sm:$0xff]
    %v377 = vld [vmem:[%s3 + $0x4f0] sm:$0xff]
    %v378 = vld [vmem:[%s3 + $0x4f8] sm:$0xff]
    %v379 = vld [vmem:[%s3 + $0x500] sm:$0xff]
    %v380 = vld [vmem:[%s3 + $0x508] sm:$0xff]
    %v381 = vld [vmem:[%s3 + $0x510] sm:$0xff]
    %v382 = vld [vmem:[%s3 + $0x518] sm:$0xff]
    %v383 = vld [vmem:[%s3 + $0x520] sm:$0xff]
    %v384 = vld [vmem:[%s3 + $0x528] sm:$0xff]
    %v385 = vld [vmem:[%s3 + $0x530] sm:$0xff]
    %v386 = vld [vmem:[%s3 + $0x538] sm:$0xff]
    %v387 = vld [vmem:[%s3 + $0x540] sm:$0xff]
    %v388 = vld [vmem:[%s3 + $0x548] sm:$0xff]
    %v389 = vld [vmem:[%s3 + $0x550] sm:$0xff]
    %v390 = vld [vmem:[%s3 + $0x558] sm:$0xff]
    %v391 = vld [vmem:[%s3 + $0x560] sm:$0xff]
    %v392 = vld [vmem:[%s3 + $0x568] sm:$0xff]
    %v393 = vld [vmem:[%s3 + $0x570] sm:$0xff]
    %v394 = vld [vmem:[%s3 + $0x578] sm:$0xff]
    %v395 = vld [vmem:[%s3 + $0x580] sm:$0xff]
    %v396 = vld [vmem:[%s3 + $0x588] sm:$0xff]
    %v397 = vld [vmem:[%s3 + $0x590] sm:$0xff]
    %v398 = vld [vmem:[%s3 + $0x598] sm:$0xff]
    %v399 = vld [vmem:[%s3 + $0x5a0] sm:$0xff]
    %v400 = vld [vmem:[%s3 + $0x5a8] sm:$0xff]
    %v401 = vld [vmem:[%s3 + $0x5b0] sm:$0xff]
    %v402 = vld [vmem:[%s3 + $0x5b8] sm:$0xff]
    %v403 = vld [vmem:[%s3 + $0x5c0] sm:$0xff]
    %v404 = vld [vmem:[%s3 + $0x5c8] sm:$0xff]
    %v405 = vld [vmem:[%s3 + $0x5d0] sm:$0xff]
    %v406 = vld [vmem:[%s3 + $0x5d8] sm:$0xff]
    %v407 = vld [vmem:[%s3 + $0x5e0] sm:$0xff]
    %v408 = vld [vmem:[%s3 + $0x5e8] sm:$0xff]
    %v409 = vld [vmem:[%s3 + $0x5f0] sm:$0xff]
    %v410 = vld [vmem:[%s3 + $0x5f8] sm:$0xff]
    %v411 = vld [vmem:[%s3 + $0x600] sm:$0xff]
    %v412 = vld [vmem:[%s3 + $0x608] sm:$0xff]
    %v413 = vld [vmem:[%s3 + $0x610] sm:$0xff]
    %v414 = vld [vmem:[%s3 + $0x618] sm:$0xff]
    %v415 = vld [vmem:[%s3 + $0x620] sm:$0xff]
    %v416 = vld [vmem:[%s3 + $0x628] sm:$0xff]
    %v417 = vld [vmem:[%s3 + $0x630] sm:$0xff]
    %v418 = vld [vmem:[%s3 + $0x638] sm:$0xff]
    %v419 = vld [vmem:[%s3 + $0x640] sm:$0xff]
    %v420 = vld [vmem:[%s3 + $0x648] sm:$0xff]
    %v421 = vld [vmem:[%s3 + $0x650] sm:$0xff]
    %v422 = vld [vmem:[%s3 + $0x658] sm:$0xff]
    %v423 = vld [vmem:[%s3 + $0x660] sm:$0xff]
    %v424 = vld [vmem:[%s3 + $0x668] sm:$0xff]
    %v425 = vld [vmem:[%s3 + $0x670] sm:$0xff]
    %v426 = vld [vmem:[%s3 + $0x678] sm:$0xff]
    %v427 = vld [vmem:[%s3 + $0x680] sm:$0xff]
    %v428 = vld [vmem:[%s3 + $0x688] sm:$0xff]
    %v429 = vld [vmem:[%s3 + $0x690] sm:$0xff]
    %v430 = vld [vmem:[%s3 + $0x698] sm:$0xff]
    %v431 = vld [vmem:[%s3 + $0x6a0] sm:$0xff]
    %v432 = vld [vmem:[%s3 + $0x6a8] sm:$0xff]
    %v433 = vld [vmem:[%s3 + $0x6b0] sm:$0xff]
    %v434 = vld [vmem:[%s3 + $0x6b8] sm:$0xff]
    %v435 = vld [vmem:[%s3 + $0x6c0] sm:$0xff]
    %v436 = vld [vmem:[%s3 + $0x6c8] sm:$0xff]
    %v437 = vld [vmem:[%s3 + $0x6d0] sm:$0xff]
    %v438 = vld [vmem:[%s3 + $0x6d8] sm:$0xff]
    %v439 = vld [vmem:[%s3 + $0x6e0] sm:$0xff]
    %v440 = vld [vmem:[%s3 + $0x6e8] sm:$0xff]
    %v441 = vld [vmem:[%s3 + $0x6f0] sm:$0xff]
    %v442 = vld [vmem:[%s3 + $0x6f8] sm:$0xff]
    %v443 = vld [vmem:[%s3 + $0x700] sm:$0xff]
    %v444 = vld [vmem:[%s3 + $0x708] sm:$0xff]
    %v445 = vld [vmem:[%s3 + $0x710] sm:$0xff]
    %v446 = vld [vmem:[%s3 + $0x718] sm:$0xff]
    %v447 = vld [vmem:[%s3 + $0x720] sm:$0xff]
    %v448 = vld [vmem:[%s3 + $0x728] sm:$0xff]
    %v449 = vld [vmem:[%s3 + $0x730] sm:$0xff]
    %v450 = vld [vmem:[%s3 + $0x738] sm:$0xff]
    %v451 = vld [vmem:[%s3 + $0x740] sm:$0xff]
    %v452 = vld [vmem:[%s3 + $0x748] sm:$0xff]
    %v453 = vld [vmem:[%s3 + $0x750] sm:$0xff]
    %v454 = vld [vmem:[%s3 + $0x758] sm:$0xff]
    %v455 = vld [vmem:[%s3 + $0x760] sm:$0xff]
    %v456 = vld [vmem:[%s3 + $0x768] sm:$0xff]
    %v457 = vld [vmem:[%s3 + $0x770] sm:$0xff]
    %v458 = vld [vmem:[%s3 + $0x778] sm:$0xff]
    %v459 = vld [vmem:[%s3 + $0x780] sm:$0xff]
    %v460 = vld [vmem:[%s3 + $0x788] sm:$0xff]
    %v461 = vld [vmem:[%s3 + $0x790] sm:$0xff]
    %v462 = vld [vmem:[%s3 + $0x798] sm:$0xff]
    %v463 = vld [vmem:[%s3 + $0x7a0] sm:$0xff]
    %v464 = vld [vmem:[%s3 + $0x7a8] sm:$0xff]
    %v465 = vld [vmem:[%s3 + $0x7b0] sm:$0xff]
    %v466 = vld [vmem:[%s3 + $0x7b8] sm:$0xff]
    %v467 = vld [vmem:[%s3 + $0x7c0] sm:$0xff]
    %v468 = vld [vmem:[%s3 + $0x7c8] sm:$0xff]
    %v469 = vld [vmem:[%s3 + $0x7d0] sm:$0xff]
    %v470 = vld [vmem:[%s3 + $0x7d8] sm:$0xff]
    %v471 = vld [vmem:[%s3 + $0x7e0] sm:$0xff]
    %v472 = vld [vmem:[%s3 + $0x7e8] sm:$0xff]
    %v473 = vld [vmem:[%s3 + $0x7f0] sm:$0xff]
    %v474 = vld [vmem:[%s3 + $0x7f8] sm:$0xff]
    %v475 = vld [vmem:[%s3 + $0x800] sm:$0xff]
    %v476 = vld [vmem:[%s3 + $0x808] sm:$0xff]
    %v477 = vld [vmem:[%s3 + $0x810] sm:$0xff]
    %v478 = vld [vmem:[%s3 + $0x818] sm:$0xff]
    %v479 = vld [vmem:[%s3 + $0x820] sm:$0xff]
    %v480 = vld [vmem:[%s3 + $0x828] sm:$0xff]
    %v481 = vld [vmem:[%s3 + $0x830] sm:$0xff]
    %v482 = vld [vmem:[%s3 + $0x838] sm:$0xff]
    %v483 = vld [vmem:[%s3 + $0x840] sm:$0xff]
    %v484 = vld [vmem:[%s3 + $0x848] sm:$0xff]
    %v485 = vld [vmem:[%s3 + $0x850] sm:$0xff]
    %v486 = vld [vmem:[%s3 + $0x858] sm:$0xff]
    %v487 = vld [vmem:[%s3 + $0x860] sm:$0xff]
    %v488 = vld [vmem:[%s3 + $0x868] sm:$0xff]
    %v489 = vld [vmem:[%s3 + $0x870] sm:$0xff]
    %v490 = vld [vmem:[%s3 + $0x878] sm:$0xff]
    %v491 = vld [vmem:[%s3 + $0x880] sm:$0xff]
    %v492 = vld [vmem:[%s3 + $0x888] sm:$0xff]
    %v493 = vld [vmem:[%s3 + $0x890] sm:$0xff]
    %v494 = vld [vmem:[%s3 + $0x898] sm:$0xff]
    %v495 = vld [vmem:[%s3 + $0x8a0] sm:$0xff]
    %v496 = vld [vmem:[%s3 + $0x8a8] sm:$0xff]
    %v497 = vld [vmem:[%s3 + $0x8b0] sm:$0xff]
    %v498 = vld [vmem:[%s3 + $0x8b8] sm:$0xff]
    %v499 = vld [vmem:[%s3 + $0x8c0] sm:$0xff]
    %v500 = vld [vmem:[%s3 + $0x8c8] sm:$0xff]
    %v501 = vld [vmem:[%s3 + $0x8d0] sm:$0xff]
    %v502 = vld [vmem:[%s3 + $0x8d8] sm:$0xff]
    %v503 = vld [vmem:[%s3 + $0x8e0] sm:$0xff]
    %v504 = vld [vmem:[%s3 + $0x8e8] sm:$0xff]
    %v505 = vld [vmem:[%s3 + $0x8f0] sm:$0xff]
    %v506 = vld [vmem:[%s3 + $0x8f8] sm:$0xff]
    %v507 = vld [vmem:[%s3 + $0x900] sm:$0xff]
    %v508 = vld [vmem:[%s3 + $0x908] sm:$0xff]
    %v509 = vld [vmem:[%s3 + $0x910] sm:$0xff]
    %v510 = vld [vmem:[%s3 + $0x918] sm:$0xff]
    %v511 = vld [vmem:[%s3 + $0x920] sm:$0xff]
    %v512 = vld [vmem:[%s3 + $0x928] sm:$0xff]
    %v513 = vld [vmem:[%s3 + $0x930] sm:$0xff]
    %v514 = vld [vmem:[%s3 + $0x938] sm:$0xff]
    %v515 = vld [vmem:[%s3 + $0x940] sm:$0xff]
    %v516 = vld [vmem:[%s3 + $0x948] sm:$0xff]
    %v517 = vld [vmem:[%s3 + $0x950] sm:$0xff]
    %v518 = vld [vmem:[%s3 + $0x958] sm:$0xff]
    %v519 = vld [vmem:[%s3 + $0x960] sm:$0xff]
    %v520 = vld [vmem:[%s3 + $0x968] sm:$0xff]
    %v521 = vld [vmem:[%s3 + $0x970] sm:$0xff]
    %v522 = vld [vmem:[%s3 + $0x978] sm:$0xff]
    %v523 = vld [vmem:[%s3 + $0x980] sm:$0xff]
    %v524 = vld [vmem:[%s3 + $0x988] sm:$0xff]
    %v525 = vld [vmem:[%s3 + $0x990] sm:$0xff]
    %v526 = vld [vmem:[%s3 + $0x998] sm:$0xff]
    %v527 = vld [vmem:[%s3 + $0x9a0] sm:$0xff]
    %v528 = vld [vmem:[%s3 + $0x9a8] sm:$0xff]
    %v529 = vld [vmem:[%s3 + $0x9b0] sm:$0xff]
    %v530 = vld [vmem:[%s3 + $0x9b8] sm:$0xff]
    %v531 = vld [vmem:[%s3 + $0x9c0] sm:$0xff]
    %v532 = vld [vmem:[%s3 + $0x9c8] sm:$0xff]
    %v533 = vld [vmem:[%s3 + $0x9d0] sm:$0xff]
    %v534 = vld [vmem:[%s3 + $0x9d8] sm:$0xff]
    %v535 = vld [vmem:[%s3 + $0x9e0] sm:$0xff]
    %v536 = vld [vmem:[%s3 + $0x9e8] sm:$0xff]
    %v537 = vld [vmem:[%s3 + $0x9f0] sm:$0xff]
    %v538 = vld [vmem:[%s3 + $0x9f8] sm:$0xff]
    %v539 = vld [vmem:[%s3 + $0xa00] sm:$0xff]
    %v540 = vld [vmem:[%s3 + $0xa08] sm:$0xff]
    %v541 = vld [vmem:[%s3 + $0xa10] sm:$0xff]
    %v542 = vld [vmem:[%s3 + $0xa18] sm:$0xff]
    %v543 = vld [vmem:[%s3 + $0xa20] sm:$0xff]
    %v544 = vld [vmem:[%s3 + $0xa28] sm:$0xff]
    %v545 = vld [vmem:[%s3 + $0xa30] sm:$0xff]
    %v546 = vld [vmem:[%s3 + $0xa38] sm:$0xff]
    %v547 = vld [vmem:[%s3 + $0xa40] sm:$0xff]
    %v548 = vld [vmem:[%s3 + $0xa48] sm:$0xff]
    %v549 = vld [vmem:[%s3 + $0xa50] sm:$0xff]
    %v550 = vld [vmem:[%s3 + $0xa58] sm:$0xff]
    %v551 = vld [vmem:[%s3 + $0xa60] sm:$0xff]
    %v552 = vld [vmem:[%s3 + $0xa68] sm:$0xff]
    %v553 = vld [vmem:[%s3 + $0xa70] sm:$0xff]
    %v554 = vld [vmem:[%s3 + $0xa78] sm:$0xff]
    %v555 = vld [vmem:[%s3 + $0xa80] sm:$0xff]
    %v556 = vld [vmem:[%s3 + $0xa88] sm:$0xff]
    %v557 = vld [vmem:[%s3 + $0xa90] sm:$0xff]
    %v558 = vld [vmem:[%s3 + $0xa98] sm:$0xff]
    %v559 = vld [vmem:[%s3 + $0xaa0] sm:$0xff]
    %v560 = vld [vmem:[%s3 + $0xaa8] sm:$0xff]
    %v561 = vld [vmem:[%s3 + $0xab0] sm:$0xff]
    %v562 = vld [vmem:[%s3 + $0xab8] sm:$0xff]
    %v563 = vld [vmem:[%s3 + $0xac0] sm:$0xff]
    %v564 = vld [vmem:[%s3 + $0xac8] sm:$0xff]
    %v565 = vld [vmem:[%s3 + $0xad0] sm:$0xff]
    %v566 = vld [vmem:[%s3 + $0xad8] sm:$0xff]
    %v567 = vld [vmem:[%s3 + $0xae0] sm:$0xff]
    %v568 = vld [vmem:[%s3 + $0xae8] sm:$0xff]
    %v569 = vld [vmem:[%s3 + $0xaf0] sm:$0xff]
    %v570 = vld [vmem:[%s3 + $0xaf8] sm:$0xff]
    %v571 = vld [vmem:[%s3 + $0xb00] sm:$0xff]
    %v572 = vld [vmem:[%s3 + $0xb08] sm:$0xff]
    %v573 = vld [vmem:[%s3 + $0xb10] sm:$0xff]
    %v574 = vld [vmem:[%s3 + $0xb18] sm:$0xff]
    %v575 = vld [vmem:[%s3 + $0xb20] sm:$0xff]
    %v576 = vld [vmem:[%s3 + $0xb28] sm:$0xff]
    %v577 = vld [vmem:[%s3 + $0xb30] sm:$0xff]
    %v578 = vld [vmem:[%s3 + $0xb38] sm:$0xff]
    %v579 = vld [vmem:[%s3 + $0xb40] sm:$0xff]
    %v580 = vld [vmem:[%s3 + $0xb48] sm:$0xff]
    %v581 = vld [vmem:[%s3 + $0xb50] sm:$0xff]
    %v582 = vld [vmem:[%s3 + $0xb58] sm:$0xff]
    %v583 = vld [vmem:[%s3 + $0xb60] sm:$0xff]
    %v584 = vld [vmem:[%s3 + $0xb68] sm:$0xff]
    %v585 = vld [vmem:[%s3 + $0xb70] sm:$0xff]
    %v586 = vld [vmem:[%s3 + $0xb78] sm:$0xff]
    %v587 = vld [vmem:[%s3 + $0xb80] sm:$0xff]
    %v588 = vld [vmem:[%s3 + $0xb88] sm:$0xff]
    %v589 = vld [vmem:[%s3 + $0xb90] sm:$0xff]
    %v590 = vld [vmem:[%s3 + $0xb98] sm:$0xff]
    %v591 = vld [vmem:[%s3 + $0xba0] sm:$0xff]
    %v592 = vld [vmem:[%s3 + $0xba8] sm:$0xff]
    %v593 = vld [vmem:[%s3 + $0xbb0] sm:$0xff]
    %v594 = vld [vmem:[%s3 + $0xbb8] sm:$0xff]
    %v595 = vld [vmem:[%s3 + $0xbc0] sm:$0xff]
    %v596 = vld [vmem:[%s3 + $0xbc8] sm:$0xff]
    %v597 = vld [vmem:[%s3 + $0xbd0] sm:$0xff]
    %v598 = vld [vmem:[%s3 + $0xbd8] sm:$0xff]
    %v599 = vld [vmem:[%s3 + $0xbe0] sm:$0xff]
    %v600 = vld [vmem:[%s3 + $0xbe8] sm:$0xff]
    %v601 = vld [vmem:[%s3 + $0xbf0] sm:$0xff]
    %v602 = vld [vmem:[%s3 + $0xbf8] sm:$0xff]
    %v603 = vld [vmem:[%s3 + $0xc00] sm:$0xff]
    %v604 = vld [vmem:[%s3 + $0xc08] sm:$0xff]
    %v605 = vld [vmem:[%s3 + $0xc10] sm:$0xff]
    %v606 = vld [vmem:[%s3 + $0xc18] sm:$0xff]
    %v607 = vld [vmem:[%s3 + $0xc20] sm:$0xff]
    %v608 = vld [vmem:[%s3 + $0xc28] sm:$0xff]
    %v609 = vld [vmem:[%s3 + $0xc30] sm:$0xff]
    %v610 = vld [vmem:[%s3 + $0xc38] sm:$0xff]
    %v611 = vld [vmem:[%s3 + $0xc40] sm:$0xff]
    %v612 = vld [vmem:[%s3 + $0xc48] sm:$0xff]
    %v613 = vld [vmem:[%s3 + $0xc50] sm:$0xff]
    %v614 = vld [vmem:[%s3 + $0xc58] sm:$0xff]
    %v615 = vld [vmem:[%s3 + $0xc60] sm:$0xff]
    %v616 = vld [vmem:[%s3 + $0xc68] sm:$0xff]
    %v617 = vld [vmem:[%s3 + $0xc70] sm:$0xff]
    %v618 = vld [vmem:[%s3 + $0xc78] sm:$0xff]
    %v619 = vld [vmem:[%s3 + $0xc80] sm:$0xff]
    %v620 = vld [vmem:[%s3 + $0xc88] sm:$0xff]
    %v621 = vld [vmem:[%s3 + $0xc90] sm:$0xff]
    %v622 = vld [vmem:[%s3 + $0xc98] sm:$0xff]
    %v623 = vld [vmem:[%s3 + $0xca0] sm:$0xff]
    %v624 = vld [vmem:[%s3 + $0xca8] sm:$0xff]
    %v625 = vld [vmem:[%s3 + $0xcb0] sm:$0xff]
    %v626 = vld [vmem:[%s3 + $0xcb8] sm:$0xff]
    %v627 = vld [vmem:[%s3 + $0xcc0] sm:$0xff]
    %v628 = vld [vmem:[%s3 + $0xcc8] sm:$0xff]
    %v629 = vld [vmem:[%s3 + $0xcd0] sm:$0xff]
    %v630 = vld [vmem:[%s3 + $0xcd8] sm:$0xff]
    %v631 = vld [vmem:[%s3 + $0xce0] sm:$0xff]
    %v632 = vld [vmem:[%s3 + $0xce8] sm:$0xff]
    %v633 = vld [vmem:[%s3 + $0xcf0] sm:$0xff]
    %v634 = vld [vmem:[%s3 + $0xcf8] sm:$0xff]
    %v635 = vld [vmem:[%s3 + $0xd00] sm:$0xff]
    %v636 = vld [vmem:[%s3 + $0xd08] sm:$0xff]
    %v637 = vld [vmem:[%s3 + $0xd10] sm:$0xff]
    %v638 = vld [vmem:[%s3 + $0xd18] sm:$0xff]
    %v639 = vld [vmem:[%s3 + $0xd20] sm:$0xff]
    %v640 = vld [vmem:[%s3 + $0xd28] sm:$0xff]
    %v641 = vld [vmem:[%s3 + $0xd30] sm:$0xff]
    %v642 = vld [vmem:[%s3 + $0xd38] sm:$0xff]
    %v643 = vld [vmem:[%s3 + $0xd40] sm:$0xff]
    %v644 = vld [vmem:[%s3 + $0xd48] sm:$0xff]
    %v645 = vld [vmem:[%s3 + $0xd50] sm:$0xff]
    %v646 = vld [vmem:[%s3 + $0xd58] sm:$0xff]
    %v647 = vld [vmem:[%s3 + $0xd60] sm:$0xff]
    %v648 = vld [vmem:[%s3 + $0xd68] sm:$0xff]
    %v649 = vld [vmem:[%s3 + $0xd70] sm:$0xff]
    %v650 = vld [vmem:[%s3 + $0xd78] sm:$0xff]
    %v651 = vld [vmem:[%s3 + $0xd80] sm:$0xff]
    %v652 = vld [vmem:[%s3 + $0xd88] sm:$0xff]
    %v653 = vld [vmem:[%s3 + $0xd90] sm:$0xff]
    %v654 = vld [vmem:[%s3 + $0xd98] sm:$0xff]
    %v655 = vld [vmem:[%s3 + $0xda0] sm:$0xff]
    %v656 = vld [vmem:[%s3 + $0xda8] sm:$0xff]
    %v657 = vld [vmem:[%s3 + $0xdb0] sm:$0xff]
    %v658 = vld [vmem:[%s3 + $0xdb8] sm:$0xff]
    %v659 = vld [vmem:[%s3 + $0xdc0] sm:$0xff]
    %v660 = vld [vmem:[%s3 + $0xdc8] sm:$0xff]
    %v661 = vld [vmem:[%s3 + $0xdd0] sm:$0xff]
    %v662 = vld [vmem:[%s3 + $0xdd8] sm:$0xff]
    %v663 = vld [vmem:[%s3 + $0xde0] sm:$0xff]
    %v664 = vld [vmem:[%s3 + $0xde8] sm:$0xff]
    %v665 = vld [vmem:[%s3 + $0xdf0] sm:$0xff]
    %v666 = vld [vmem:[%s3 + $0xdf8] sm:$0xff]
    %v667 = vld [vmem:[%s4] sm:$0xff]
    %v669 = vlaneseq
    %v670 = vshrl.u32 %v669, 7
    %v671 = vsub.s32 0, %v670
    %v672 = vrot.slane %v667, %v671
    %v673 = vlaneseq
    %v674 = vshrl.u32 %v673, 7
    %v675 = vsub.s32 1, %v674
    %v676 = vrot.slane %v667, %v675
    %v677 = vlaneseq
    %v678 = vshrl.u32 %v677, 7
    %v679 = vsub.s32 2, %v678
    %v680 = vrot.slane %v667, %v679
    %v681 = vlaneseq
    %v682 = vshrl.u32 %v681, 7
    %v683 = vsub.s32 3, %v682
    %v684 = vrot.slane %v667, %v683
    %v685 = vlaneseq
    %v686 = vshrl.u32 %v685, 7
    %v687 = vsub.s32 4, %v686
    %v688 = vrot.slane %v667, %v687
    %v689 = vlaneseq
    %v690 = vshrl.u32 %v689, 7
    %v691 = vsub.s32 5, %v690
    %v692 = vrot.slane %v667, %v691
    %v693 = vlaneseq
    %v694 = vshrl.u32 %v693, 7
    %v695 = vsub.s32 6, %v694
    %v696 = vrot.slane %v667, %v695
    %704 = vmatprep.subr.mxu0 %v220
    %705 = vmatpush1.msra.mxu0 %v219
    %706 = vmatprep.subr.mxu0 %v227
    %707 = vmatpush1.msra.mxu0 %v226
    %708 = vmatprep.subr.mxu0 %v234
    %709 = vmatpush1.msra.mxu0 %v233
    %710 = vmatprep.subr.mxu0 %v241
    %711 = vmatpush1.msra.mxu0 %v240
    %712 = vmatprep.subr.mxu0 %v248
    %713 = vmatpush1.msra.mxu0 %v247
    %714 = vmatprep.subr.mxu0 %v255
    %715 = vmatpush1.msra.mxu0 %v254
    %716 = vmatprep.subr.mxu0 %v262
    %717 = vmatpush1.msra.mxu0 %v261
    %718 = vmatprep.subr.mxu0 %v269
    %719 = vmatpush1.msra.mxu0 %v268
    %720 = vmatprep.subr.mxu0 %v276
    %721 = vmatpush1.msra.mxu0 %v275
    %722 = vmatprep.subr.mxu0 %v283
    %723 = vmatpush1.msra.mxu0 %v282
    %724 = vmatprep.subr.mxu0 %v290
    %725 = vmatpush1.msra.mxu0 %v289
    %726 = vmatprep.subr.mxu0 %v297
    %727 = vmatpush1.msra.mxu0 %v296
    %728 = vmatprep.subr.mxu0 %v304
    %729 = vmatpush1.msra.mxu0 %v303
    %730 = vmatprep.subr.mxu0 %v311
    %731 = vmatpush1.msra.mxu0 %v310
    %732 = vmatprep.subr.mxu0 %v318
    %733 = vmatpush1.msra.mxu0 %v317
    %734 = vmatprep.subr.mxu0 %v325
    %735 = vmatpush1.msra.mxu0 %v324
    %736 = vmatprep.subr.mxu0 %v332
    %737 = vmatpush1.msra.mxu0 %v331
    %738 = vmatprep.subr.mxu0 %v339
    %739 = vmatpush1.msra.mxu0 %v338
    %740 = vmatprep.subr.mxu0 %v346
    %741 = vmatpush1.msra.mxu0 %v345
    %742 = vmatprep.subr.mxu0 %v353
    %743 = vmatpush1.msra.mxu0 %v352
    %744 = vmatprep.subr.mxu0 %v360
    %745 = vmatpush1.msra.mxu0 %v359
    %746 = vmatprep.subr.mxu0 %v367
    %747 = vmatpush1.msra.mxu0 %v366
    %748 = vmatprep.subr.mxu0 %v374
    %749 = vmatpush1.msra.mxu0 %v373
    %750 = vmatprep.subr.mxu0 %v381
    %751 = vmatpush1.msra.mxu0 %v380
    %752 = vmatprep.subr.mxu0 %v388
    %753 = vmatpush1.msra.mxu0 %v387
    %754 = vmatprep.subr.mxu0 %v395
    %755 = vmatpush1.msra.mxu0 %v394
    %756 = vmatprep.subr.mxu0 %v402
    %757 = vmatpush1.msra.mxu0 %v401
    %758 = vmatprep.subr.mxu0 %v409
    %759 = vmatpush1.msra.mxu0 %v408
    %760 = vmatprep.subr.mxu0 %v416
    %761 = vmatpush1.msra.mxu0 %v415
    %762 = vmatprep.subr.mxu0 %v423
    %763 = vmatpush1.msra.mxu0 %v422
    %764 = vmatprep.subr.mxu0 %v430
    %765 = vmatpush1.msra.mxu0 %v429
    %766 = vmatprep.subr.mxu0 %v437
    %767 = vmatpush1.msra.mxu0 %v436
    %768 = vmatprep.mubr.f32.mxu0 %v216
    %769 = vmatmul.mubr.f32.gmra.mrb[0].mxu0 %v215
    %v770 = vpop.f32.mrb[0].mxu0
    %v771 = vadd.f32 %v672, %v770
    %v772 = vpop.f32.mrb[0].mxu0
    %v773 = vadd.f32 %v676, %v772
    %774 = vdwg.mxu0
    %775 = vmatprep.subr.mxu0 %v444
    %776 = vmatpush1.msra.mxu0 %v443
    %777 = vmatprep.subr.mxu0 %v451
    %778 = vmatpush1.msra.mxu0 %v450
    %779 = vmatprep.subr.mxu0 %v458
    %780 = vmatpush1.msra.mxu0 %v457
    %781 = vmatprep.subr.mxu0 %v465
    %782 = vmatpush1.msra.mxu0 %v464
    %783 = vmatprep.subr.mxu0 %v472
    %784 = vmatpush1.msra.mxu0 %v471
    %785 = vmatprep.subr.mxu0 %v479
    %786 = vmatpush1.msra.mxu0 %v478
    %787 = vmatprep.subr.mxu0 %v486
    %788 = vmatpush1.msra.mxu0 %v485
    %789 = vmatprep.subr.mxu0 %v493
    %790 = vmatpush1.msra.mxu0 %v492
    %791 = vmatprep.subr.mxu0 %v500
    %792 = vmatpush1.msra.mxu0 %v499
    %793 = vmatprep.subr.mxu0 %v507
    %794 = vmatpush1.msra.mxu0 %v506
    %795 = vmatprep.subr.mxu0 %v514
    %796 = vmatpush1.msra.mxu0 %v513
    %797 = vmatprep.subr.mxu0 %v521
    %798 = vmatpush1.msra.mxu0 %v520
    %799 = vmatprep.subr.mxu0 %v528
    %800 = vmatpush1.msra.mxu0 %v527
    %801 = vmatprep.subr.mxu0 %v535
    %802 = vmatpush1.msra.mxu0 %v534
    %803 = vmatprep.subr.mxu0 %v542
    %804 = vmatpush1.msra.mxu0 %v541
    %805 = vmatprep.subr.mxu0 %v549
    %806 = vmatpush1.msra.mxu0 %v548
    %807 = vmatprep.subr.mxu0 %v556
    %808 = vmatpush1.msra.mxu0 %v555
    %809 = vmatprep.subr.mxu0 %v563
    %810 = vmatpush1.msra.mxu0 %v562
    %811 = vmatprep.subr.mxu0 %v570
    %812 = vmatpush1.msra.mxu0 %v569
    %813 = vmatprep.subr.mxu0 %v577
    %814 = vmatpush1.msra.mxu0 %v576
    %815 = vmatprep.subr.mxu0 %v584
    %816 = vmatpush1.msra.mxu0 %v583
    %817 = vmatprep.subr.mxu0 %v591
    %818 = vmatpush1.msra.mxu0 %v590
    %819 = vmatprep.subr.mxu0 %v598
    %820 = vmatpush1.msra.mxu0 %v597
    %821 = vmatprep.subr.mxu0 %v605
    %822 = vmatpush1.msra.mxu0 %v604
    %823 = vmatprep.subr.mxu0 %v612
    %824 = vmatpush1.msra.mxu0 %v611
    %825 = vmatprep.subr.mxu0 %v619
    %826 = vmatpush1.msra.mxu0 %v618
    %827 = vmatprep.subr.mxu0 %v626
    %828 = vmatpush1.msra.mxu0 %v625
    %829 = vmatprep.subr.mxu0 %v633
    %830 = vmatpush1.msra.mxu0 %v632
    %831 = vmatprep.subr.mxu0 %v640
    %832 = vmatpush1.msra.mxu0 %v639
    %833 = vmatprep.subr.mxu0 %v647
    %834 = vmatpush1.msra.mxu0 %v646
    %835 = vmatprep.subr.mxu0 %v654
    %836 = vmatpush1.msra.mxu0 %v653
    %837 = vmatprep.subr.mxu0 %v661
    %838 = vmatpush1.msra.mxu0 %v660
    %839 = vmatprep.mubr.f32.mxu0 %v218
    %840 = vmatmul.mubr.f32.gmra.mrb[0].mxu0 %v217
    %v841 = vpop.f32.mrb[0].mxu0
    %v842 = vadd.f32 %v771, %v841
    %v843 = vpop.f32.mrb[0].mxu0
    %v844 = vadd.f32 %v773, %v843
    %845 = vdwg.mxu0
    %846 = vmatprep.subr.mxu0 %v222
    %847 = vmatpush1.msra.mxu0 %v221
    %848 = vmatprep.subr.mxu0 %v229
    %849 = vmatpush1.msra.mxu0 %v228
    %850 = vmatprep.subr.mxu0 %v236
    %851 = vmatpush1.msra.mxu0 %v235
    %852 = vmatprep.subr.mxu0 %v243
    %853 = vmatpush1.msra.mxu0 %v242
    %854 = vmatprep.subr.mxu0 %v250
    %855 = vmatpush1.msra.mxu0 %v249
    %856 = vmatprep.subr.mxu0 %v257
    %857 = vmatpush1.msra.mxu0 %v256
    %858 = vmatprep.subr.mxu0 %v264
    %859 = vmatpush1.msra.mxu0 %v263
    %860 = vmatprep.subr.mxu0 %v271
    %861 = vmatpush1.msra.mxu0 %v270
    %862 = vmatprep.subr.mxu0 %v278
    %863 = vmatpush1.msra.mxu0 %v277
    %864 = vmatprep.subr.mxu0 %v285
    %865 = vmatpush1.msra.mxu0 %v284
    %866 = vmatprep.subr.mxu0 %v292
    %867 = vmatpush1.msra.mxu0 %v291
    %868 = vmatprep.subr.mxu0 %v299
    %869 = vmatpush1.msra.mxu0 %v298
    %870 = vmatprep.subr.mxu0 %v306
    %871 = vmatpush1.msra.mxu0 %v305
    %872 = vmatprep.subr.mxu0 %v313
    %873 = vmatpush1.msra.mxu0 %v312
    %874 = vmatprep.subr.mxu0 %v320
    %875 = vmatpush1.msra.mxu0 %v319
    %876 = vmatprep.subr.mxu0 %v327
    %877 = vmatpush1.msra.mxu0 %v326
    %878 = vmatprep.subr.mxu0 %v334
    %879 = vmatpush1.msra.mxu0 %v333
    %880 = vmatprep.subr.mxu0 %v341
    %881 = vmatpush1.msra.mxu0 %v340
    %882 = vmatprep.subr.mxu0 %v348
    %883 = vmatpush1.msra.mxu0 %v347
    %884 = vmatprep.subr.mxu0 %v355
    %885 = vmatpush1.msra.mxu0 %v354
    %886 = vmatprep.subr.mxu0 %v362
    %887 = vmatpush1.msra.mxu0 %v361
    %888 = vmatprep.subr.mxu0 %v369
    %889 = vmatpush1.msra.mxu0 %v368
    %890 = vmatprep.subr.mxu0 %v376
    %891 = vmatpush1.msra.mxu0 %v375
    %892 = vmatprep.subr.mxu0 %v383
    %893 = vmatpush1.msra.mxu0 %v382
    %894 = vmatprep.subr.mxu0 %v390
    %895 = vmatpush1.msra.mxu0 %v389
    %896 = vmatprep.subr.mxu0 %v397
    %897 = vmatpush1.msra.mxu0 %v396
    %898 = vmatprep.subr.mxu0 %v404
    %899 = vmatpush1.msra.mxu0 %v403
    %900 = vmatprep.subr.mxu0 %v411
    %901 = vmatpush1.msra.mxu0 %v410
    %902 = vmatprep.subr.mxu0 %v418
    %903 = vmatpush1.msra.mxu0 %v417
    %904 = vmatprep.subr.mxu0 %v425
    %905 = vmatpush1.msra.mxu0 %v424
    %906 = vmatprep.subr.mxu0 %v432
    %907 = vmatpush1.msra.mxu0 %v431
    %908 = vmatprep.subr.mxu0 %v439
    %909 = vmatpush1.msra.mxu0 %v438
    %910 = vmatprep.mubr.f32.mxu0 %v216
    %911 = vmatmul.mubr.f32.gmra.mrb[0].mxu0 %v215
    %v912 = vpop.f32.mrb[0].mxu0
    %v913 = vadd.f32 %v680, %v912
    %v914 = vpop.f32.mrb[0].mxu0
    %v915 = vadd.f32 %v684, %v914
    %916 = vdwg.mxu0
    %917 = vmatprep.subr.mxu0 %v446
    %918 = vmatpush1.msra.mxu0 %v445
    %919 = vmatprep.subr.mxu0 %v453
    %920 = vmatpush1.msra.mxu0 %v452
    %921 = vmatprep.subr.mxu0 %v460
    %922 = vmatpush1.msra.mxu0 %v459
    %923 = vmatprep.subr.mxu0 %v467
    %924 = vmatpush1.msra.mxu0 %v466
    %925 = vmatprep.subr.mxu0 %v474
    %926 = vmatpush1.msra.mxu0 %v473
    %927 = vmatprep.subr.mxu0 %v481
    %928 = vmatpush1.msra.mxu0 %v480
    %929 = vmatprep.subr.mxu0 %v488
    %930 = vmatpush1.msra.mxu0 %v487
    %931 = vmatprep.subr.mxu0 %v495
    %932 = vmatpush1.msra.mxu0 %v494
    %933 = vmatprep.subr.mxu0 %v502
    %934 = vmatpush1.msra.mxu0 %v501
    %935 = vmatprep.subr.mxu0 %v509
    %936 = vmatpush1.msra.mxu0 %v508
    %937 = vmatprep.subr.mxu0 %v516
    %938 = vmatpush1.msra.mxu0 %v515
    %939 = vmatprep.subr.mxu0 %v523
    %940 = vmatpush1.msra.mxu0 %v522
    %941 = vmatprep.subr.mxu0 %v530
    %942 = vmatpush1.msra.mxu0 %v529
    %943 = vmatprep.subr.mxu0 %v537
    %944 = vmatpush1.msra.mxu0 %v536
    %945 = vmatprep.subr.mxu0 %v544
    %946 = vmatpush1.msra.mxu0 %v543
    %947 = vmatprep.subr.mxu0 %v551
    %948 = vmatpush1.msra.mxu0 %v550
    %949 = vmatprep.subr.mxu0 %v558
    %950 = vmatpush1.msra.mxu0 %v557
    %951 = vmatprep.subr.mxu0 %v565
    %952 = vmatpush1.msra.mxu0 %v564
    %953 = vmatprep.subr.mxu0 %v572
    %954 = vmatpush1.msra.mxu0 %v571
    %955 = vmatprep.subr.mxu0 %v579
    %956 = vmatpush1.msra.mxu0 %v578
    %957 = vmatprep.subr.mxu0 %v586
    %958 = vmatpush1.msra.mxu0 %v585
    %959 = vmatprep.subr.mxu0 %v593
    %960 = vmatpush1.msra.mxu0 %v592
    %961 = vmatprep.subr.mxu0 %v600
    %962 = vmatpush1.msra.mxu0 %v599
    %963 = vmatprep.subr.mxu0 %v607
    %964 = vmatpush1.msra.mxu0 %v606
    %965 = vmatprep.subr.mxu0 %v614
    %966 = vmatpush1.msra.mxu0 %v613
    %967 = vmatprep.subr.mxu0 %v621
    %968 = vmatpush1.msra.mxu0 %v620
    %969 = vmatprep.subr.mxu0 %v628
    %970 = vmatpush1.msra.mxu0 %v627
    %971 = vmatprep.subr.mxu0 %v635
    %972 = vmatpush1.msra.mxu0 %v634
    %973 = vmatprep.subr.mxu0 %v642
    %974 = vmatpush1.msra.mxu0 %v641
    %975 = vmatprep.subr.mxu0 %v649
    %976 = vmatpush1.msra.mxu0 %v648
    %977 = vmatprep.subr.mxu0 %v656
    %978 = vmatpush1.msra.mxu0 %v655
    %979 = vmatprep.subr.mxu0 %v663
    %980 = vmatpush1.msra.mxu0 %v662
    %981 = vmatprep.mubr.f32.mxu0 %v218
    %982 = vmatmul.mubr.f32.gmra.mrb[0].mxu0 %v217
    %v983 = vpop.f32.mrb[0].mxu0
    %v984 = vadd.f32 %v913, %v983
    %v985 = vpop.f32.mrb[0].mxu0
    %v986 = vadd.f32 %v915, %v985
    %987 = vdwg.mxu0
    %988 = vmatprep.subr.mxu0 %v224
    %989 = vmatpush1.msra.mxu0 %v223
    %990 = vmatprep.subr.mxu0 %v231
    %991 = vmatpush1.msra.mxu0 %v230
    %992 = vmatprep.subr.mxu0 %v238
    %993 = vmatpush1.msra.mxu0 %v237
    %994 = vmatprep.subr.mxu0 %v245
    %995 = vmatpush1.msra.mxu0 %v244
    %996 = vmatprep.subr.mxu0 %v252
    %997 = vmatpush1.msra.mxu0 %v251
    %998 = vmatprep.subr.mxu0 %v259
    %999 = vmatpush1.msra.mxu0 %v258
    %1000 = vmatprep.subr.mxu0 %v266
    %1001 = vmatpush1.msra.mxu0 %v265
    %1002 = vmatprep.subr.mxu0 %v273
    %1003 = vmatpush1.msra.mxu0 %v272
    %1004 = vmatprep.subr.mxu0 %v280
    %1005 = vmatpush1.msra.mxu0 %v279
    %1006 = vmatprep.subr.mxu0 %v287
    %1007 = vmatpush1.msra.mxu0 %v286
    %1008 = vmatprep.subr.mxu0 %v294
    %1009 = vmatpush1.msra.mxu0 %v293
    %1010 = vmatprep.subr.mxu0 %v301
    %1011 = vmatpush1.msra.mxu0 %v300
    %1012 = vmatprep.subr.mxu0 %v308
    %1013 = vmatpush1.msra.mxu0 %v307
    %1014 = vmatprep.subr.mxu0 %v315
    %1015 = vmatpush1.msra.mxu0 %v314
    %1016 = vmatprep.subr.mxu0 %v322
    %1017 = vmatpush1.msra.mxu0 %v321
    %1018 = vmatprep.subr.mxu0 %v329
    %1019 = vmatpush1.msra.mxu0 %v328
    %1020 = vmatprep.subr.mxu0 %v336
    %1021 = vmatpush1.msra.mxu0 %v335
    %1022 = vmatprep.subr.mxu0 %v343
    %1023 = vmatpush1.msra.mxu0 %v342
    %1024 = vmatprep.subr.mxu0 %v350
    %1025 = vmatpush1.msra.mxu0 %v349
    %1026 = vmatprep.subr.mxu0 %v357
    %1027 = vmatpush1.msra.mxu0 %v356
    %1028 = vmatprep.subr.mxu0 %v364
    %1029 = vmatpush1.msra.mxu0 %v363
    %1030 = vmatprep.subr.mxu0 %v371
    %1031 = vmatpush1.msra.mxu0 %v370
    %1032 = vmatprep.subr.mxu0 %v378
    %1033 = vmatpush1.msra.mxu0 %v377
    %1034 = vmatprep.subr.mxu0 %v385
    %1035 = vmatpush1.msra.mxu0 %v384
    %1036 = vmatprep.subr.mxu0 %v392
    %1037 = vmatpush1.msra.mxu0 %v391
    %1038 = vmatprep.subr.mxu0 %v399
    %1039 = vmatpush1.msra.mxu0 %v398
    %1040 = vmatprep.subr.mxu0 %v406
    %1041 = vmatpush1.msra.mxu0 %v405
    %1042 = vmatprep.subr.mxu0 %v413
    %1043 = vmatpush1.msra.mxu0 %v412
    %1044 = vmatprep.subr.mxu0 %v420
    %1045 = vmatpush1.msra.mxu0 %v419
    %1046 = vmatprep.subr.mxu0 %v427
    %1047 = vmatpush1.msra.mxu0 %v426
    %1048 = vmatprep.subr.mxu0 %v434
    %1049 = vmatpush1.msra.mxu0 %v433
    %1050 = vmatprep.subr.mxu0 %v441
    %1051 = vmatpush1.msra.mxu0 %v440
    %1052 = vmatprep.mubr.f32.mxu0 %v216
    %1053 = vmatmul.mubr.f32.gmra.mrb[0].mxu0 %v215
    %v1054 = vpop.f32.mrb[0].mxu0
    %v1055 = vadd.f32 %v688, %v1054
    %v1056 = vpop.f32.mrb[0].mxu0
    %v1057 = vadd.f32 %v692, %v1056
    %1058 = vdwg.mxu0
    %1059 = vmatprep.subr.mxu0 %v448
    %1060 = vmatpush1.msra.mxu0 %v447
    %1061 = vmatprep.subr.mxu0 %v455
    %1062 = vmatpush1.msra.mxu0 %v454
    %1063 = vmatprep.subr.mxu0 %v462
    %1064 = vmatpush1.msra.mxu0 %v461
    %1065 = vmatprep.subr.mxu0 %v469
    %1066 = vmatpush1.msra.mxu0 %v468
    %1067 = vmatprep.subr.mxu0 %v476
    %1068 = vmatpush1.msra.mxu0 %v475
    %1069 = vmatprep.subr.mxu0 %v483
    %1070 = vmatpush1.msra.mxu0 %v482
    %1071 = vmatprep.subr.mxu0 %v490
    %1072 = vmatpush1.msra.mxu0 %v489
    %1073 = vmatprep.subr.mxu0 %v497
    %1074 = vmatpush1.msra.mxu0 %v496
    %1075 = vmatprep.subr.mxu0 %v504
    %1076 = vmatpush1.msra.mxu0 %v503
    %1077 = vmatprep.subr.mxu0 %v511
    %1078 = vmatpush1.msra.mxu0 %v510
    %1079 = vmatprep.subr.mxu0 %v518
    %1080 = vmatpush1.msra.mxu0 %v517
    %1081 = vmatprep.subr.mxu0 %v525
    %1082 = vmatpush1.msra.mxu0 %v524
    %1083 = vmatprep.subr.mxu0 %v532
    %1084 = vmatpush1.msra.mxu0 %v531
    %1085 = vmatprep.subr.mxu0 %v539
    %1086 = vmatpush1.msra.mxu0 %v538
    %1087 = vmatprep.subr.mxu0 %v546
    %1088 = vmatpush1.msra.mxu0 %v545
    %1089 = vmatprep.subr.mxu0 %v553
    %1090 = vmatpush1.msra.mxu0 %v552
    %1091 = vmatprep.subr.mxu0 %v560
    %1092 = vmatpush1.msra.mxu0 %v559
    %1093 = vmatprep.subr.mxu0 %v567
    %1094 = vmatpush1.msra.mxu0 %v566
    %1095 = vmatprep.subr.mxu0 %v574
    %1096 = vmatpush1.msra.mxu0 %v573
    %1097 = vmatprep.subr.mxu0 %v581
    %1098 = vmatpush1.msra.mxu0 %v580
    %1099 = vmatprep.subr.mxu0 %v588
    %1100 = vmatpush1.msra.mxu0 %v587
    %1101 = vmatprep.subr.mxu0 %v595
    %1102 = vmatpush1.msra.mxu0 %v594
    %1103 = vmatprep.subr.mxu0 %v602
    %1104 = vmatpush1.msra.mxu0 %v601
    %1105 = vmatprep.subr.mxu0 %v609
    %1106 = vmatpush1.msra.mxu0 %v608
    %1107 = vmatprep.subr.mxu0 %v616
    %1108 = vmatpush1.msra.mxu0 %v615
    %1109 = vmatprep.subr.mxu0 %v623
    %1110 = vmatpush1.msra.mxu0 %v622
    %1111 = vmatprep.subr.mxu0 %v630
    %1112 = vmatpush1.msra.mxu0 %v629
    %1113 = vmatprep.subr.mxu0 %v637
    %1114 = vmatpush1.msra.mxu0 %v636
    %1115 = vmatprep.subr.mxu0 %v644
    %1116 = vmatpush1.msra.mxu0 %v643
    %1117 = vmatprep.subr.mxu0 %v651
    %1118 = vmatpush1.msra.mxu0 %v650
    %1119 = vmatprep.subr.mxu0 %v658
    %1120 = vmatpush1.msra.mxu0 %v657
    %1121 = vmatprep.subr.mxu0 %v665
    %1122 = vmatpush1.msra.mxu0 %v664
    %1123 = vmatprep.mubr.f32.mxu0 %v218
    %1124 = vmatmul.mubr.f32.gmra.mrb[0].mxu0 %v217
    %v1125 = vpop.f32.mrb[0].mxu0
    %v1126 = vadd.f32 %v1055, %v1125
    %v1127 = vpop.f32.mrb[0].mxu0
    %v1128 = vadd.f32 %v1057, %v1127
    %1129 = vdwg.mxu0
    %1130 = vmatprep.subr.mxu0 0.0
    %1131 = vmatpush1.msra.mxu0 %v225
    %1132 = vmatprep.subr.mxu0 0.0
    %1133 = vmatpush1.msra.mxu0 %v232
    %1134 = vmatprep.subr.mxu0 0.0
    %1135 = vmatpush1.msra.mxu0 %v239
    %1136 = vmatprep.subr.mxu0 0.0
    %1137 = vmatpush1.msra.mxu0 %v246
    %1138 = vmatprep.subr.mxu0 0.0
    %1139 = vmatpush1.msra.mxu0 %v253
    %1140 = vmatprep.subr.mxu0 0.0
    %1141 = vmatpush1.msra.mxu0 %v260
    %1142 = vmatprep.subr.mxu0 0.0
    %1143 = vmatpush1.msra.mxu0 %v267
    %1144 = vmatprep.subr.mxu0 0.0
    %1145 = vmatpush1.msra.mxu0 %v274
    %1146 = vmatprep.subr.mxu0 0.0
    %1147 = vmatpush1.msra.mxu0 %v281
    %1148 = vmatprep.subr.mxu0 0.0
    %1149 = vmatpush1.msra.mxu0 %v288
    %1150 = vmatprep.subr.mxu0 0.0
    %1151 = vmatpush1.msra.mxu0 %v295
    %1152 = vmatprep.subr.mxu0 0.0
    %1153 = vmatpush1.msra.mxu0 %v302
    %1154 = vmatprep.subr.mxu0 0.0
    %1155 = vmatpush1.msra.mxu0 %v309
    %1156 = vmatprep.subr.mxu0 0.0
    %1157 = vmatpush1.msra.mxu0 %v316
    %1158 = vmatprep.subr.mxu0 0.0
    %1159 = vmatpush1.msra.mxu0 %v323
    %1160 = vmatprep.subr.mxu0 0.0
    %1161 = vmatpush1.msra.mxu0 %v330
    %1162 = vmatprep.subr.mxu0 0.0
    %1163 = vmatpush1.msra.mxu0 %v337
    %1164 = vmatprep.subr.mxu0 0.0
    %1165 = vmatpush1.msra.mxu0 %v344
    %1166 = vmatprep.subr.mxu0 0.0
    %1167 = vmatpush1.msra.mxu0 %v351
    %1168 = vmatprep.subr.mxu0 0.0
    %1169 = vmatpush1.msra.mxu0 %v358
    %1170 = vmatprep.subr.mxu0 0.0
    %1171 = vmatpush1.msra.mxu0 %v365
    %1172 = vmatprep.subr.mxu0 0.0
    %1173 = vmatpush1.msra.mxu0 %v372
    %1174 = vmatprep.subr.mxu0 0.0
    %1175 = vmatpush1.msra.mxu0 %v379
    %1176 = vmatprep.subr.mxu0 0.0
    %1177 = vmatpush1.msra.mxu0 %v386
    %1178 = vmatprep.subr.mxu0 0.0
    %1179 = vmatpush1.msra.mxu0 %v393
    %1180 = vmatprep.subr.mxu0 0.0
    %1181 = vmatpush1.msra.mxu0 %v400
    %1182 = vmatprep.subr.mxu0 0.0
    %1183 = vmatpush1.msra.mxu0 %v407
    %1184 = vmatprep.subr.mxu0 0.0
    %1185 = vmatpush1.msra.mxu0 %v414
    %1186 = vmatprep.subr.mxu0 0.0
    %1187 = vmatpush1.msra.mxu0 %v421
    %1188 = vmatprep.subr.mxu0 0.0
    %1189 = vmatpush1.msra.mxu0 %v428
    %1190 = vmatprep.subr.mxu0 0.0
    %1191 = vmatpush1.msra.mxu0 %v435
    %1192 = vmatprep.subr.mxu0 0.0
    %1193 = vmatpush1.msra.mxu0 %v442
    %1194 = vmatprep.mubr.f32.mxu0 %v216
    %1195 = vmatmul.mubr.f32.gmra.mrb[0].mxu0 %v215
    %v1196 = vpop.f32.mrb[0].mxu0
    %v1197 = vadd.f32 %v696, %v1196
    %v1198 = vpop.f32.mrb[0].mxu0
    %1199 = vdwg.mxu0
    %1200 = vmatprep.subr.mxu0 0.0
    %1201 = vmatpush1.msra.mxu0 %v449
    %1202 = vmatprep.subr.mxu0 0.0
    %1203 = vmatpush1.msra.mxu0 %v456
    %1204 = vmatprep.subr.mxu0 0.0
    %1205 = vmatpush1.msra.mxu0 %v463
    %1206 = vmatprep.subr.mxu0 0.0
    %1207 = vmatpush1.msra.mxu0 %v470
    %1208 = vmatprep.subr.mxu0 0.0
    %1209 = vmatpush1.msra.mxu0 %v477
    %1210 = vmatprep.subr.mxu0 0.0
    %1211 = vmatpush1.msra.mxu0 %v484
    %1212 = vmatprep.subr.mxu0 0.0
    %1213 = vmatpush1.msra.mxu0 %v491
    %1214 = vmatprep.subr.mxu0 0.0
    %1215 = vmatpush1.msra.mxu0 %v498
    %1216 = vmatprep.subr.mxu0 0.0
    %1217 = vmatpush1.msra.mxu0 %v505
    %1218 = vmatprep.subr.mxu0 0.0
    %1219 = vmatpush1.msra.mxu0 %v512
    %1220 = vmatprep.subr.mxu0 0.0
    %1221 = vmatpush1.msra.mxu0 %v519
    %1222 = vmatprep.subr.mxu0 0.0
    %1223 = vmatpush1.msra.mxu0 %v526
    %1224 = vmatprep.subr.mxu0 0.0
    %1225 = vmatpush1.msra.mxu0 %v533
    %1226 = vmatprep.subr.mxu0 0.0
    %1227 = vmatpush1.msra.mxu0 %v540
    %1228 = vmatprep.subr.mxu0 0.0
    %1229 = vmatpush1.msra.mxu0 %v547
    %1230 = vmatprep.subr.mxu0 0.0
    %1231 = vmatpush1.msra.mxu0 %v554
    %1232 = vmatprep.subr.mxu0 0.0
    %1233 = vmatpush1.msra.mxu0 %v561
    %1234 = vmatprep.subr.mxu0 0.0
    %1235 = vmatpush1.msra.mxu0 %v568
    %1236 = vmatprep.subr.mxu0 0.0
    %1237 = vmatpush1.msra.mxu0 %v575
    %1238 = vmatprep.subr.mxu0 0.0
    %1239 = vmatpush1.msra.mxu0 %v582
    %1240 = vmatprep.subr.mxu0 0.0
    %1241 = vmatpush1.msra.mxu0 %v589
    %1242 = vmatprep.subr.mxu0 0.0
    %1243 = vmatpush1.msra.mxu0 %v596
    %1244 = vmatprep.subr.mxu0 0.0
    %1245 = vmatpush1.msra.mxu0 %v603
    %1246 = vmatprep.subr.mxu0 0.0
    %1247 = vmatpush1.msra.mxu0 %v610
    %1248 = vmatprep.subr.mxu0 0.0
    %1249 = vmatpush1.msra.mxu0 %v617
    %1250 = vmatprep.subr.mxu0 0.0
    %1251 = vmatpush1.msra.mxu0 %v624
    %1252 = vmatprep.subr.mxu0 0.0
    %1253 = vmatpush1.msra.mxu0 %v631
    %1254 = vmatprep.subr.mxu0 0.0
    %1255 = vmatpush1.msra.mxu0 %v638
    %1256 = vmatprep.subr.mxu0 0.0
    %1257 = vmatpush1.msra.mxu0 %v645
    %1258 = vmatprep.subr.mxu0 0.0
    %1259 = vmatpush1.msra.mxu0 %v652
    %1260 = vmatprep.subr.mxu0 0.0
    %1261 = vmatpush1.msra.mxu0 %v659
    %1262 = vmatprep.subr.mxu0 0.0
    %1263 = vmatpush1.msra.mxu0 %v666
    %1264 = vmatprep.mubr.f32.mxu0 %v218
    %1265 = vmatmul.mubr.f32.gmra.mrb[0].mxu0 %v217
    %v1266 = vpop.f32.mrb[0].mxu0
    %v1267 = vadd.f32 %v1197, %v1266
    %v1268 = vpop.f32.mrb[0].mxu0
    %1269 = vdwg.mxu0
    %v1270 = vxor.u32 %v842, 2147483648
    %v1271 = vxor.u32 %v844, 2147483648
    %v1272 = vxor.u32 %v984, 2147483648
    %v1273 = vxor.u32 %v986, 2147483648
    %v1274 = vxor.u32 %v1126, 2147483648
    %v1275 = vxor.u32 %v1128, 2147483648
    %v1276 = vxor.u32 %v1267, 2147483648
    %v1277 = vmul.f32 %v1270, 1.442695
    %v1278 = vpow.pop %v1277
    %v1279 = vmul.f32 %v1271, 1.442695
    %v1280 = vpow.pop %v1279
    %v1281 = vmul.f32 %v1272, 1.442695
    %v1282 = vpow.pop %v1281
    %v1283 = vmul.f32 %v1273, 1.442695
    %v1284 = vpow.pop %v1283
    %v1285 = vmul.f32 %v1274, 1.442695
    %v1286 = vpow.pop %v1285
    %v1287 = vmul.f32 %v1275, 1.442695
    %v1288 = vpow.pop %v1287
    %v1289 = vmul.f32 %v1276, 1.442695
    %v1290 = vpow.pop %v1289
    %v1291 = vadd.f32 %v1278, 1.0
    %v1292 = vadd.f32 %v1280, 1.0
    %v1293 = vadd.f32 %v1282, 1.0
    %v1294 = vadd.f32 %v1284, 1.0
    %v1295 = vadd.f32 %v1286, 1.0
    %v1296 = vadd.f32 %v1288, 1.0
    %v1297 = vadd.f32 %v1290, 1.0
    %v1298 = vrcp.pop %v1291
    %v1299 = vmul.f32 1.0, %v1298
    %v1300 = vrcp.pop %v1292
    %v1301 = vmul.f32 1.0, %v1300
    %v1302 = vrcp.pop %v1293
    %v1303 = vmul.f32 1.0, %v1302
    %v1304 = vrcp.pop %v1294
    %v1305 = vmul.f32 1.0, %v1304
    %v1306 = vrcp.pop %v1295
    %v1307 = vmul.f32 1.0, %v1306
    %v1308 = vrcp.pop %v1296
    %v1309 = vmul.f32 1.0, %v1308
    %v1310 = vrcp.pop %v1297
    %v1311 = vmul.f32 1.0, %v1310
    %1312 = vst [vmem:[#allocation2] sm:$0xff] %v1299
    %1313 = vst [vmem:[#allocation2 + $0x8] sm:$0xff] %v1301
    %1314 = vst [vmem:[#allocation2 + $0x10] sm:$0xff] %v1303
    %1315 = vst [vmem:[#allocation2 + $0x18] sm:$0xff] %v1305
    %1316 = vst [vmem:[#allocation2 + $0x20] sm:$0xff] %v1307
    %1317 = vst [vmem:[#allocation2 + $0x28] sm:$0xff] %v1309
    %1318 = vst [vmem:[#allocation2 + $0x30] sm:$0xff] %v1311
    // Predicated region
    $region22: #{generative_forward.1} parent=1 // pred_check
      _
    $region23: #{generative_forward.1} parent=1 // pred_check_branch
      %1320 = sbr.rel (0) target = $region25
    $region24: #{generative_forward.1} parent=1 // pred_region
      %s1322 = ssub.s32 896, 896
      %1323 = vsyncadd [#allocation3], %s1322
      %s1325 = sshll.u32 [#allocation2], 4
      %s1326 = int_to_ptr.vmem [resolvable:$true] %s1325
      %1328 = dma.vmem_to_hbm [thread:$0]  %s1326, 896, %s5, [#allocation3]
    $region25: #{generative_forward.1} parent=1 // pred_fallthru
      _
    // Predicated region
    $region26: #{generative_forward.1} parent=1 // pred_check
      _
    $region27: #{generative_forward.1} parent=1 // pred_check_branch
      %1330 = sbr.rel (0) target = $region29
    $region28: #{generative_forward.1} parent=1 // pred_region
      %1331 = dma.done [#allocation3], 896
    $region29: #{generative_forward.1} parent=1 // pred_fallthru
      _
    %1332 = vsyncpa [#allocation3], 1

</llo_original>
